<compile_context>
chip_gen: v6e
topology: v6e:2x2x1
jax: 0.10.0
libtpu: 0.0.40
codegen_flags: <defaults>
</compile_context>

<pallas_src>
import jax
import jax.numpy as jnp
from jax import lax
from jax.experimental import pallas as pl
from jax.experimental.pallas import tpu as pltpu

HIDDEN = 64  # MLP hidden width (fixed by the PyTorch module)


def _round_up(x: int, m: int) -> int:
    return ((x + m - 1) // m) * m


def _actor_kernel(x_ref, act_ref, w1_t_ref, b1_ref, w2_t_ref, b2_ref, out_ref):
    """One batch tile.

    x_ref   : (tile_b, obs_dim) f32   natural-layout observations
    act_ref : (1, tile_b)       i32   chosen actions (batch on lanes)
    w1_t    : (HIDDEN, obs_dim), b1: (HIDDEN, 1)
    w2_t    : (A, HIDDEN),       b2: (A, 1)
    out_ref : (slab_rows, tile_b) f32  rows 0..A-1 = logits^T, row A = log_prob
    """
    a_dim = w2_t_ref.shape[0]

    # h = tanh(W1 @ x^T + b1): contract the feature axes directly so no
    # transpose of the obs tile is ever materialized (MXU A@B^T form).
    h = jnp.tanh(
        lax.dot_general(
            w1_t_ref[...], x_ref[...],
            dimension_numbers=(((1,), (1,)), ((), ())),
            preferred_element_type=jnp.float32,
        ) + b1_ref[...]
    )                                                        # (HIDDEN, tile_b)
    # NOTE: tanh over (HIDDEN, tile_b) f32 is the dominant EUP load; on v5e
    # this can become the binding unit once HBM/step overhead are fixed.

    # logits^T = W2 @ h + b2 : lane-dense over the batch.
    logits_t = (
        jnp.dot(w2_t_ref[...], h, preferred_element_type=jnp.float32)
        + b2_ref[...]
    )                                                        # (A, tile_b)

    # Categorical(logits).log_prob(action) == log_softmax(logits)[action],
    # computed with the action axis on sublanes (cheap <= 8-row reductions).
    m = jnp.max(logits_t, axis=0, keepdims=True)             # (1, tile_b)
    z = logits_t - m
    lse = jnp.log(jnp.sum(jnp.exp(z), axis=0, keepdims=True))
    log_probs_t = z - lse                                    # (A, tile_b)

    # Gather the chosen action via one-hot (no dynamic vreg gather on TPU).
    row = lax.broadcasted_iota(jnp.int32, log_probs_t.shape, 0)
    onehot = (row == act_ref[...]).astype(jnp.float32)
    logp = jnp.sum(onehot * log_probs_t, axis=0, keepdims=True)  # (1, tile_b)

    # Fused, lane-dense output slab: one output DMA per step instead of two.
    out_ref[0:a_dim, :] = logits_t
    out_ref[a_dim:a_dim + 1, :] = logp
    # rows a_dim+1.. of the slab (if any) are padding and never read back.


def _pick_tile_b(batch: int, max_tile: int = 8192) -> int:
    """Rows per grid step: big enough to amortize the ~0.35us step overhead,
    but keep >= 2 grid steps when the batch allows it so the 'parallel' batch
    axis can shard across TensorCores on megacore parts (v7x)."""
    full = _round_up(max(batch, 1), 128)
    if full > max_tile:
        return max_tile
    if full >= 2 * 128:
        return _round_up(pl.cdiv(full, 2), 128)
    return full


def _vmem_limit_bytes(tile_b: int, obs_dim: int, slab_rows: int) -> int:
    """Rough scoped-VMEM budget derived from the tile size (+ headroom)."""
    f32 = 4
    lane = lambda d: _round_up(max(d, 1), 128)
    sub = lambda d: _round_up(max(d, 1), 8)
    # double-buffered streamed blocks (VMEM footprints are (8,128)-tile padded)
    streamed = 2 * f32 * (
        sub(tile_b) * lane(obs_dim)          # obs block
        + sub(1) * lane(tile_b)              # action block
        + sub(slab_rows) * lane(tile_b)      # fused output slab
    )
    # resident weights/biases (still double-buffered by the pipeline)
    weights = 2 * f32 * (
        sub(HIDDEN) * lane(obs_dim) + sub(HIDDEN) * lane(1)
        + sub(slab_rows) * lane(HIDDEN) + sub(slab_rows) * lane(1)
    )
    # compiler scratch for in-kernel intermediates (h, exp, one-hot, ...)
    scratch = 4 * f32 * sub(HIDDEN) * lane(tile_b)
    total = streamed + weights + scratch + (4 << 20)
    # >= 32 MiB (covers v5e's 16 MiB default), <= 48 MiB (headroom on v7x 64 MiB)
    return min(max(total, 32 << 20), 48 << 20)


def categorical_actor_forward(obs, action, params, *, tile_b=None,
                              batch_major_logits=True):
    """Forward pass of CategoricalActor.

    obs: (B, obs_dim) f32, action: (B,) int.
    Returns (logits, log_prob):
      logits   : (B, A) f32 (PyTorch layout) if batch_major_logits, else the
                 lane-dense (A, B) kernel layout (skips one HBM transpose pass),
      log_prob : (B,) f32 == Categorical(logits=...).log_prob(action).
    """
    w1, b1, w2, b2 = params          # stored (in, out) like nn.Linear.weight.T
    B, obs_dim = obs.shape
    A = w2.shape[1]

    if tile_b is None:
        tile_b = _pick_tile_b(B)
    assert tile_b % 128 == 0, "tile_b must be a multiple of 128 (lane width)"
    num_tiles = pl.cdiv(B, tile_b)
    slab_rows = _round_up(A + 1, 8)          # logits rows + one log_prob row

    # Cheap layout plumbing only (no full-array pad/transpose of obs).
    act_row = action.astype(jnp.int32).reshape(1, B)     # batch on lanes
    w1_t = w1.T.astype(jnp.float32)          # (HIDDEN, obs_dim)
    w2_t = w2.T.astype(jnp.float32)          # (A, HIDDEN)
    b1_c = b1.reshape(HIDDEN, 1).astype(jnp.float32)
    b2_c = b2.reshape(A, 1).astype(jnp.float32)

    out = pl.pallas_call(
        _actor_kernel,
        out_shape=jax.ShapeDtypeStruct((slab_rows, B), jnp.float32),
        grid=(num_tiles,),
        in_specs=[
            # streamed per tile; Pallas handles the partial last block, and
            # the garbage columns it produces are sliced away below.
            pl.BlockSpec((tile_b, obs_dim), lambda i: (i, 0)),
            pl.BlockSpec((1, tile_b), lambda i: (0, i)),
            # weights/biases: constant index map -> VMEM-resident across steps
            pl.BlockSpec((HIDDEN, obs_dim), lambda i: (0, 0)),
            pl.BlockSpec((HIDDEN, 1), lambda i: (0, 0)),
            pl.BlockSpec((A, HIDDEN), lambda i: (0, 0)),
            pl.BlockSpec((A, 1), lambda i: (0, 0)),
        ],
        out_specs=pl.BlockSpec((slab_rows, tile_b), lambda i: (0, i)),
        compiler_params=pltpu.CompilerParams(
            dimension_semantics=("parallel",),   # megacore sharding on v7x
            vmem_limit_bytes=_vmem_limit_bytes(tile_b, obs_dim, slab_rows),
        ),
    )(obs.astype(jnp.float32), act_row, w1_t, b1_c, w2_t, b2_c)

    logits_t = out[:A, :]                    # (A, B) lane-dense
    log_prob = out[A, :]                     # (B,)
    logits = logits_t.T if batch_major_logits else logits_t
    # TODO(synk): only the logits / log_prob of the Categorical distribution
    # are produced; sampling and entropy of the distribution object are not
    # implemented in-kernel.
    return logits, log_prob


def init_params(key, obs_dim, action_dim):
    """Deterministic init mimicking nn.Linear's uniform(-1/sqrt(fan_in), ...)."""
    k1, k2, k3, k4 = jax.random.split(key, 4)
    lim1 = 1.0 / jnp.sqrt(jnp.float32(obs_dim))
    lim2 = 1.0 / jnp.sqrt(jnp.float32(HIDDEN))
    w1 = jax.random.uniform(k1, (obs_dim, HIDDEN), jnp.float32, -lim1, lim1)
    b1 = jax.random.uniform(k2, (HIDDEN,), jnp.float32, -lim1, lim1)
    w2 = jax.random.uniform(k3, (HIDDEN, action_dim), jnp.float32, -lim2, lim2)
    b2 = jax.random.uniform(k4, (action_dim,), jnp.float32, -lim2, lim2)
    return (w1, b1, w2, b2)


if __name__ == "__main__":
    key = jax.random.PRNGKey(0)
    k_obs, k_act, k_param = jax.random.split(key, 3)

    # Small shapes; B is deliberately NOT a multiple of the tile so the run
    # exercises two grid steps, a partial last block, and resident-weight reuse.
    B, OBS_DIM, ACTION_DIM = 200, 16, 6
    obs = jax.random.normal(k_obs, (B, OBS_DIM), dtype=jnp.float32)
    action = jax.random.randint(k_act, (B,), 0, ACTION_DIM, dtype=jnp.int32)
    params = init_params(k_param, OBS_DIM, ACTION_DIM)

    logits, log_prob = categorical_actor_forward(obs, action, params)
    jax.block_until_ready((logits, log_prob))

    # sanity check vs. pure-JAX reference
    w1, b1, w2, b2 = params
    h_ref = jnp.tanh(obs @ w1 + b1)
    logits_ref = h_ref @ w2 + b2
    logp_ref = jax.nn.log_softmax(logits_ref, axis=-1)[jnp.arange(B), action]
    assert logits.shape == (B, ACTION_DIM) and log_prob.shape == (B,)
    assert jnp.allclose(logits, logits_ref, atol=1e-5)
    assert jnp.allclose(log_prob, logp_ref, atol=1e-5)

    print("KERNEL_OK")
</pallas_src>

<mosaic_0001>
module attributes {stable_mosaic.version = 11 : i64} {
  func.func @_actor_kernel(%arg0: i32, %arg1: memref<128x16xf32, #tpu.memory_space<vmem>>, %arg2: memref<1x128xi32, #tpu.memory_space<vmem>>, %arg3: memref<64x16xf32, #tpu.memory_space<vmem>>, %arg4: memref<64x1xf32, #tpu.memory_space<vmem>>, %arg5: memref<6x64xf32, #tpu.memory_space<vmem>>, %arg6: memref<6x1xf32, #tpu.memory_space<vmem>>, %arg7: memref<8x128xf32, #tpu.memory_space<vmem>>) attributes {dimension_semantics = [#tpu.dimension_semantics<parallel>], iteration_bounds = array<i64: 2>, scalar_prefetch = 0 : i64, scratch_operands = 0 : i64, tpu.core_type = #tpu.core_type<tc>, window_params = [{transform_indices = @transform_0, window_bounds = array<i64: 128, 16>}, {transform_indices = @transform_1, window_bounds = array<i64: 1, 128>}, {pipeline_mode = #tpu.pipeline_mode<synchronous>, transform_indices = @transform_2, window_bounds = array<i64: 64, 16>}, {pipeline_mode = #tpu.pipeline_mode<synchronous>, transform_indices = @transform_3, window_bounds = array<i64: 64, 1>}, {pipeline_mode = #tpu.pipeline_mode<synchronous>, transform_indices = @transform_4, window_bounds = array<i64: 6, 64>}, {pipeline_mode = #tpu.pipeline_mode<synchronous>, transform_indices = @transform_5, window_bounds = array<i64: 6, 1>}, {transform_indices = @transform_6, window_bounds = array<i64: 8, 128>}]} {
    %c0 = arith.constant 0 : index
    %c0_0 = arith.constant 0 : index
    %0 = vector.load %arg3[%c0, %c0_0] : memref<64x16xf32, #tpu.memory_space<vmem>>, vector<64x16xf32>
    %c0_1 = arith.constant 0 : index
    %c0_2 = arith.constant 0 : index
    %1 = vector.load %arg1[%c0_1, %c0_2] : memref<128x16xf32, #tpu.memory_space<vmem>>, vector<128x16xf32>
    %cst = arith.constant dense<0.000000e+00> : vector<64x128xf32>
    %2 = tpu.matmul %0, %1, %cst {dimension_numbers = #tpu.dot_dimension_numbers<[1], [1], [0], [0], [0, 0, 1, 0], [], []>} : vector<64x16xf32>, vector<128x16xf32>, vector<64x128xf32> -> vector<64x128xf32>
    %c0_3 = arith.constant 0 : index
    %c0_4 = arith.constant 0 : index
    %3 = vector.load %arg4[%c0_3, %c0_4] : memref<64x1xf32, #tpu.memory_space<vmem>>, vector<64x1xf32>
    %4 = vector.broadcast %3 : vector<64x1xf32> to vector<64x128xf32>
    %5 = arith.addf %2, %4 : vector<64x128xf32>
    %6 = math.tanh %5 : vector<64x128xf32>
    %c0_5 = arith.constant 0 : index
    %c0_6 = arith.constant 0 : index
    %7 = vector.load %arg5[%c0_5, %c0_6] : memref<6x64xf32, #tpu.memory_space<vmem>>, vector<6x64xf32>
    %cst_7 = arith.constant dense<0.000000e+00> : vector<6x128xf32>
    %8 = tpu.matmul %7, %6, %cst_7 {dimension_numbers = #tpu.dot_dimension_numbers<[1], [0], [0], [1], [0, 0, 1, 1], [], []>} : vector<6x64xf32>, vector<64x128xf32>, vector<6x128xf32> -> vector<6x128xf32>
    %c0_8 = arith.constant 0 : index
    %c0_9 = arith.constant 0 : index
    %9 = vector.load %arg6[%c0_8, %c0_9] : memref<6x1xf32, #tpu.memory_space<vmem>>, vector<6x1xf32>
    %10 = vector.broadcast %9 : vector<6x1xf32> to vector<6x128xf32>
    %11 = arith.addf %8, %10 : vector<6x128xf32>
    %cst_10 = arith.constant dense<0xFF800000> : vector<128xf32>
    %12 = vector.multi_reduction <maximumf>, %11, %cst_10 [0] : vector<6x128xf32> to vector<128xf32>
    %13 = vector.shape_cast %12 : vector<128xf32> to vector<1x128xf32>
    %14 = vector.broadcast %13 : vector<1x128xf32> to vector<6x128xf32>
    %15 = arith.subf %11, %14 : vector<6x128xf32>
    %16 = math.exp %15 : vector<6x128xf32>
    %cst_11 = arith.constant dense<0.000000e+00> : vector<128xf32>
    %17 = vector.multi_reduction <add>, %16, %cst_11 [0] : vector<6x128xf32> to vector<128xf32>
    %18 = vector.shape_cast %17 : vector<128xf32> to vector<1x128xf32>
    %19 = math.log %18 : vector<1x128xf32>
    %20 = vector.broadcast %19 : vector<1x128xf32> to vector<6x128xf32>
    %21 = arith.subf %15, %20 : vector<6x128xf32>
    %22 = tpu.iota {dimensions = array<i32: 0>} : vector<6x128xi32>
    %c0_12 = arith.constant 0 : index
    %c0_13 = arith.constant 0 : index
    %23 = vector.load %arg2[%c0_12, %c0_13] : memref<1x128xi32, #tpu.memory_space<vmem>>, vector<1x128xi32>
    %24 = vector.broadcast %23 : vector<1x128xi32> to vector<6x128xi32>
    %25 = arith.cmpi eq, %22, %24 : vector<6x128xi32>
    %26 = arith.extui %25 : vector<6x128xi1> to vector<6x128xi32>
    %27 = arith.sitofp %26 : vector<6x128xi32> to vector<6x128xf32>
    %28 = arith.mulf %27, %21 : vector<6x128xf32>
    %cst_14 = arith.constant dense<0.000000e+00> : vector<128xf32>
    %29 = vector.multi_reduction <add>, %28, %cst_14 [0] : vector<6x128xf32> to vector<128xf32>
    %30 = vector.shape_cast %29 : vector<128xf32> to vector<1x128xf32>
    %c0_15 = arith.constant 0 : index
    %c0_16 = arith.constant 0 : index
    %31 = vector.load %arg7[%c0_15, %c0_16] : memref<8x128xf32, #tpu.memory_space<vmem>>, vector<6x128xf32>
    tpu.vector_store %arg7[%c0_15, %c0_16], %11 {strides = array<i32>} : memref<8x128xf32, #tpu.memory_space<vmem>>, vector<6x128xf32>,
    %c6 = arith.constant 6 : index
    %c0_17 = arith.constant 0 : index
    %32 = vector.load %arg7[%c6, %c0_17] : memref<8x128xf32, #tpu.memory_space<vmem>>, vector<1x128xf32>
    tpu.vector_store %arg7[%c6, %c0_17], %30 {strides = array<i32>} : memref<8x128xf32, #tpu.memory_space<vmem>>, vector<1x128xf32>,
    return
  }
  func.func @transform_0(%arg0: i32) -> (i32, i32) {
    %c0_i32 = arith.constant 0 : i32
    %c0_i32_0 = arith.constant 0 : i32
    return %arg0, %c0_i32 : i32, i32
  }
  func.func @transform_1(%arg0: i32) -> (i32, i32) {
    %c0_i32 = arith.constant 0 : i32
    %c0_i32_0 = arith.constant 0 : i32
    return %c0_i32, %arg0 : i32, i32
  }
  func.func @transform_2(%arg0: i32) -> (i32, i32) {
    %c0_i32 = arith.constant 0 : i32
    %c0_i32_0 = arith.constant 0 : i32
    %c0_i32_1 = arith.constant 0 : i32
    return %c0_i32, %c0_i32_0 : i32, i32
  }
  func.func @transform_3(%arg0: i32) -> (i32, i32) {
    %c0_i32 = arith.constant 0 : i32
    %c0_i32_0 = arith.constant 0 : i32
    %c0_i32_1 = arith.constant 0 : i32
    return %c0_i32, %c0_i32_0 : i32, i32
  }
  func.func @transform_4(%arg0: i32) -> (i32, i32) {
    %c0_i32 = arith.constant 0 : i32
    %c0_i32_0 = arith.constant 0 : i32
    %c0_i32_1 = arith.constant 0 : i32
    return %c0_i32, %c0_i32_0 : i32, i32
  }
  func.func @transform_5(%arg0: i32) -> (i32, i32) {
    %c0_i32 = arith.constant 0 : i32
    %c0_i32_0 = arith.constant 0 : i32
    %c0_i32_1 = arith.constant 0 : i32
    return %c0_i32, %c0_i32_0 : i32, i32
  }
  func.func @transform_6(%arg0: i32) -> (i32, i32) {
    %c0_i32 = arith.constant 0 : i32
    %c0_i32_0 = arith.constant 0 : i32
    return %c0_i32, %arg0 : i32, i32
  }
}

</mosaic_0001>

<llo_original>
// kernel: tpu_custom_call.1
$region0: #{tpu_custom_call.1}
  #allocation0 [shape = 'u32[]', space=smem, size = 0x4, offset = 0x4, fixed_abs, tag = 'smem constant byte address 0x4 - core index']
  #allocation1 [shape = 'u32[144,128]{1,0:T(1,128)}', space=vmem, size = 0x12000, scoped, tag = 'internal scratch']
  %s0 = inlined_call_operand.vmem [shape: f32[200,16], index: 0, kind: input, shape index: {}]
  %s1 = inlined_call_operand.vmem [shape: s32[1,200], index: 1, kind: input, shape index: {}]
  %s2 = inlined_call_operand.vmem [shape: f32[64,16], index: 2, kind: input, shape index: {}]
  %s3 = inlined_call_operand.vmem [shape: f32[64,1], index: 3, kind: input, shape index: {}]
  %s4 = inlined_call_operand.vmem [shape: f32[6,64], index: 4, kind: input, shape index: {}]
  %s5 = inlined_call_operand.vmem [shape: f32[6,1], index: 5, kind: input, shape index: {}]
  %s6 = inlined_call_operand.hbm [shape: f32[8,200], index: 6, kind: output, shape index: {}]
  %s7 = sld [smem:[#allocation0]]
  $region57: #{tpu_custom_call.1} parent=0
    _
  %s9 = ssub.s32 1, %s7
  %s10 = scalar_select 0, %s9, %s7
  $region1: #{tpu_custom_call.1} parent=0
    #allocation2 [shape = 'u8[8192]{0}', space=vmem, size = 0x2000, scoped, tag = 'output window, operand 0']
    #allocation3 [shape = 's32[2]{0}', space=sflag, size = 0x8, scoped, tag = 'scoped memory for tpu_custom_call.1']
    %11 = vsyncpa [#allocation3], 0
    %s12 = scalar_lea.sflag [#allocation3], 1
    %13 = vsyncpa %s12, 0
    loop: start=0, step=1, limit=4
    $region2: #{tpu_custom_call.1} parent=1 // loop_pre_header
      _
    $region3: #{tpu_custom_call.1} parent=1 // loop_header
      %s15 = sphi 0, %s19
      %p16 = scmp.ge.s32.totalorder %s15, 4
      %s25 = sphi 0, %s27
      %s28 = sphi 0, %s25
      %s29 = sphi 0, %s28
      %s45 = sphi 0, %s29
      %s51 = sphi 0, %s53
      %s54 = sphi 0, %s51
      %s55 = sphi 0, %s54
      %s71 = sphi 0, %s55
      %s75 = sphi 0, %s75
      %s77 = sphi 0, %s75
      %s78 = sphi 0, %s77
      %s92 = sphi 0, %s78
      %s96 = sphi 0, %s96
      %s98 = sphi 0, %s96
      %s99 = sphi 0, %s98
      %s113 = sphi 0, %s99
      %s117 = sphi 0, %s117
      %s119 = sphi 0, %s117
      %s120 = sphi 0, %s119
      %s134 = sphi 0, %s120
      %s138 = sphi 0, %s138
      %s140 = sphi 0, %s138
      %s141 = sphi 0, %s140
      %s155 = sphi 0, %s141
      %s161 = sphi 0, %s163
      %s164 = sphi 0, %s161
      %s165 = sphi 0, %s164
      %s181 = sphi 0, %s165
    $region4: #{tpu_custom_call.1} parent=1 // loop_header_branch
      %18 = sbr.rel (%p16) target = $region8
    $region5: #{tpu_custom_call.1} parent=1 // loop_body
      %s20 = ssub.s32 %s15, 1
      %s21 = ssub.s32 %s15, 2
      %s22 = sadd.s32 %s15, 1
      %s23 = ssub.s32 %s15, %s22
      %p24 = scmp.eq.s32.totalorder %s23, 0
      %s26 = sadd.s32 %s25, 1
      %s27 = scalar_select %p24, %s25, %s26
      %p30 = pneg %p24
      %p31 = scmp.eq.s32.totalorder %s15, 1
      %p32 = por %p30, %p31
      %p33 = scmp.ne.s32.totalorder %s25, %s28
      %p34 = scmp.eq.s32.totalorder %s15, 0
      %p35 = por %p33, %p34
      %p36 = scmp.ne.s32.totalorder %s25, %s28
      %p37 = scmp.eq.s32.totalorder %s20, 1
      %p38 = por %p36, %p37
      %p39 = scmp.ne.s32.totalorder %s28, %s29
      %p40 = scmp.eq.s32.totalorder %s20, 0
      %p41 = por %p39, %p40
      %p42 = scmp.ne.s32.totalorder %s28, %s29
      %p43 = scmp.eq.s32.totalorder %s21, 1
      %p44 = por %p42, %p43
      %p46 = scmp.ne.s32.totalorder %s29, %s45
      %p47 = scmp.eq.s32.totalorder %s21, 0
      %p48 = por %p46, %p47
      %s49 = ssub.s32 %s15, %s22
      %p50 = scmp.eq.s32.totalorder %s49, 0
      %s52 = sadd.s32 %s51, 1
      %s53 = scalar_select %p50, %s51, %s52
      %p56 = pneg %p50
      %p57 = scmp.eq.s32.totalorder %s15, 1
      %p58 = por %p56, %p57
      %p59 = scmp.ne.s32.totalorder %s51, %s54
      %p60 = scmp.eq.s32.totalorder %s15, 0
      %p61 = por %p59, %p60
      %p62 = scmp.ne.s32.totalorder %s51, %s54
      %p63 = scmp.eq.s32.totalorder %s20, 1
      %p64 = por %p62, %p63
      %p65 = scmp.ne.s32.totalorder %s54, %s55
      %p66 = scmp.eq.s32.totalorder %s20, 0
      %p67 = por %p65, %p66
      %p68 = scmp.ne.s32.totalorder %s54, %s55
      %p69 = scmp.eq.s32.totalorder %s21, 1
      %p70 = por %p68, %p69
      %p72 = scmp.ne.s32.totalorder %s55, %s71
      %p73 = scmp.eq.s32.totalorder %s21, 0
      %p74 = por %p72, %p73
      %s76 = sadd.s32 %s75, 1
      %p79 = scmp.eq.s32.totalorder %s15, 1
      %p80 = scmp.ne.s32.totalorder %s75, %s77
      %p81 = scmp.eq.s32.totalorder %s15, 0
      %p82 = por %p80, %p81
      %p83 = scmp.ne.s32.totalorder %s75, %s77
      %p84 = scmp.eq.s32.totalorder %s20, 1
      %p85 = por %p83, %p84
      %p86 = scmp.ne.s32.totalorder %s77, %s78
      %p87 = scmp.eq.s32.totalorder %s20, 0
      %p88 = por %p86, %p87
      %p89 = scmp.ne.s32.totalorder %s77, %s78
      %p90 = scmp.eq.s32.totalorder %s21, 1
      %p91 = por %p89, %p90
      %p93 = scmp.ne.s32.totalorder %s78, %s92
      %p94 = scmp.eq.s32.totalorder %s21, 0
      %p95 = por %p93, %p94
      %s97 = sadd.s32 %s96, 1
      %p100 = scmp.eq.s32.totalorder %s15, 1
      %p101 = scmp.ne.s32.totalorder %s96, %s98
      %p102 = scmp.eq.s32.totalorder %s15, 0
      %p103 = por %p101, %p102
      %p104 = scmp.ne.s32.totalorder %s96, %s98
      %p105 = scmp.eq.s32.totalorder %s20, 1
      %p106 = por %p104, %p105
      %p107 = scmp.ne.s32.totalorder %s98, %s99
      %p108 = scmp.eq.s32.totalorder %s20, 0
      %p109 = por %p107, %p108
      %p110 = scmp.ne.s32.totalorder %s98, %s99
      %p111 = scmp.eq.s32.totalorder %s21, 1
      %p112 = por %p110, %p111
      %p114 = scmp.ne.s32.totalorder %s99, %s113
      %p115 = scmp.eq.s32.totalorder %s21, 0
      %p116 = por %p114, %p115
      %s118 = sadd.s32 %s117, 1
      %p121 = scmp.eq.s32.totalorder %s15, 1
      %p122 = scmp.ne.s32.totalorder %s117, %s119
      %p123 = scmp.eq.s32.totalorder %s15, 0
      %p124 = por %p122, %p123
      %p125 = scmp.ne.s32.totalorder %s117, %s119
      %p126 = scmp.eq.s32.totalorder %s20, 1
      %p127 = por %p125, %p126
      %p128 = scmp.ne.s32.totalorder %s119, %s120
      %p129 = scmp.eq.s32.totalorder %s20, 0
      %p130 = por %p128, %p129
      %p131 = scmp.ne.s32.totalorder %s119, %s120
      %p132 = scmp.eq.s32.totalorder %s21, 1
      %p133 = por %p131, %p132
      %p135 = scmp.ne.s32.totalorder %s120, %s134
      %p136 = scmp.eq.s32.totalorder %s21, 0
      %p137 = por %p135, %p136
      %s139 = sadd.s32 %s138, 1
      %p142 = scmp.eq.s32.totalorder %s15, 1
      %p143 = scmp.ne.s32.totalorder %s138, %s140
      %p144 = scmp.eq.s32.totalorder %s15, 0
      %p145 = por %p143, %p144
      %p146 = scmp.ne.s32.totalorder %s138, %s140
      %p147 = scmp.eq.s32.totalorder %s20, 1
      %p148 = por %p146, %p147
      %p149 = scmp.ne.s32.totalorder %s140, %s141
      %p150 = scmp.eq.s32.totalorder %s20, 0
      %p151 = por %p149, %p150
      %p152 = scmp.ne.s32.totalorder %s140, %s141
      %p153 = scmp.eq.s32.totalorder %s21, 1
      %p154 = por %p152, %p153
      %p156 = scmp.ne.s32.totalorder %s141, %s155
      %p157 = scmp.eq.s32.totalorder %s21, 0
      %p158 = por %p156, %p157
      %s159 = ssub.s32 %s15, %s22
      %p160 = scmp.eq.s32.totalorder %s159, 0
      %s162 = sadd.s32 %s161, 1
      %s163 = scalar_select %p160, %s161, %s162
      %p166 = pneg %p160
      %p167 = scmp.eq.s32.totalorder %s15, 1
      %p168 = por %p166, %p167
      %p169 = scmp.ne.s32.totalorder %s161, %s164
      %p170 = scmp.eq.s32.totalorder %s15, 0
      %p171 = por %p169, %p170
      %p172 = scmp.ne.s32.totalorder %s161, %s164
      %p173 = scmp.eq.s32.totalorder %s20, 1
      %p174 = por %p172, %p173
      %p175 = scmp.ne.s32.totalorder %s164, %s165
      %p176 = scmp.eq.s32.totalorder %s20, 0
      %p177 = por %p175, %p176
      %p178 = scmp.ne.s32.totalorder %s164, %s165
      %p179 = scmp.eq.s32.totalorder %s21, 1
      %p180 = por %p178, %p179
      %p182 = scmp.ne.s32.totalorder %s165, %s181
      %p183 = scmp.eq.s32.totalorder %s21, 0
      %p184 = por %p182, %p183
      %p185 = scmp.le.s32.totalorder 1, %s15
      %p186 = scmp.lt.s32.totalorder %s15, 3
      %p187 = pnand %p185, %p186
      %p188 = pneg %p187
      // Predicated region
      $region9: #{tpu_custom_call.1} parent=5 // pred_check
        _
      $region10: #{tpu_custom_call.1} parent=5 // pred_check_branch
        %190 = sbr.rel (%p187) target = $region12
      $region11: #{tpu_custom_call.1} parent=5 // pred_region
        %s191 = ssub.s32 %s15, 1
        // Predicated region
        $region13: #{tpu_custom_call.1} parent=11 // pred_check
          %p192 = pneg %p88
        $region14: #{tpu_custom_call.1} parent=11 // pred_check_branch
          %194 = sbr.rel (%p192) target = $region16
        $region15: #{tpu_custom_call.1} parent=11 // pred_region
          _
        $region16: #{tpu_custom_call.1} parent=11 // pred_fallthru
          _
        // Predicated region
        $region17: #{tpu_custom_call.1} parent=11 // pred_check
          %p195 = pneg %p109
        $region18: #{tpu_custom_call.1} parent=11 // pred_check_branch
          %197 = sbr.rel (%p195) target = $region20
        $region19: #{tpu_custom_call.1} parent=11 // pred_region
          _
        $region20: #{tpu_custom_call.1} parent=11 // pred_fallthru
          _
        // Predicated region
        $region21: #{tpu_custom_call.1} parent=11 // pred_check
          %p198 = pneg %p130
        $region22: #{tpu_custom_call.1} parent=11 // pred_check_branch
          %200 = sbr.rel (%p198) target = $region24
        $region23: #{tpu_custom_call.1} parent=11 // pred_region
          _
        $region24: #{tpu_custom_call.1} parent=11 // pred_fallthru
          _
        // Predicated region
        $region25: #{tpu_custom_call.1} parent=11 // pred_check
          %p201 = pneg %p151
        $region26: #{tpu_custom_call.1} parent=11 // pred_check_branch
          %203 = sbr.rel (%p201) target = $region28
        $region27: #{tpu_custom_call.1} parent=11 // pred_region
          _
        $region28: #{tpu_custom_call.1} parent=11 // pred_fallthru
          _
      $region12: #{tpu_custom_call.1} parent=5 // pred_fallthru
        _
      %p204 = scmp.lt.s32.totalorder %s15, 2
      // Predicated region
      $region29: #{tpu_custom_call.1} parent=5 // pred_check
        %p205 = pneg %p204
      $region30: #{tpu_custom_call.1} parent=5 // pred_check_branch
        %207 = sbr.rel (%p205) target = $region32
      $region31: #{tpu_custom_call.1} parent=5 // pred_region
        // Predicated region
        $region33: #{tpu_custom_call.1} parent=31 // pred_check
          %p208 = pneg %p35
        $region34: #{tpu_custom_call.1} parent=31 // pred_check_branch
          %210 = sbr.rel (%p208) target = $region36
        $region35: #{tpu_custom_call.1} parent=31 // pred_region
          %s211 = smul.u32 16, %s15
          %s212 = ssub.s32 25, %s211
          %p213 = scmp.lt.s32.totalorder %s212, 16
          %s214 = scalar_select %p213, %s212, 16
          %s215 = smul.u32 128, %s214
          %p216 = scmp.lt.s32.totalorder %s211, 24
          %s217 = scalar_select %p216, %s211, 24
          %s218 = smul.addr %s217, 8
          %s219 = scalar_lea.vmem %s0, %s218
          %s220 = smul.u32 16, %s15
          %s221 = ssub.s32 25, %s220
          %p222 = scmp.lt.s32.totalorder %s221, 16
          %s223 = scalar_select %p222, %s221, 16
          %s224 = smul.u32 128, %s223
        $region36: #{tpu_custom_call.1} parent=31 // pred_fallthru
          _
        // Predicated region
        $region37: #{tpu_custom_call.1} parent=31 // pred_check
          %p225 = pneg %p61
        $region38: #{tpu_custom_call.1} parent=31 // pred_check_branch
          %227 = sbr.rel (%p225) target = $region40
        $region39: #{tpu_custom_call.1} parent=31 // pred_region
          %p228 = scmp.lt.s32.totalorder %s15, 1
          %s229 = scalar_select %p228, %s15, 1
          %s230 = scalar_lea.vmem %s1, %s229
        $region40: #{tpu_custom_call.1} parent=31 // pred_fallthru
          _
      $region32: #{tpu_custom_call.1} parent=5 // pred_fallthru
        _
      %p231 = scmp.le.s32.totalorder 1, %s15
      %p232 = scmp.lt.s32.totalorder %s15, 3
      %p233 = pnand %p231, %p232
      %p234 = pneg %p233
      // Predicated region
      $region41: #{tpu_custom_call.1} parent=5 // pred_check
        _
      $region42: #{tpu_custom_call.1} parent=5 // pred_check_branch
        %236 = sbr.rel (%p233) target = $region44
      $region43: #{tpu_custom_call.1} parent=5 // pred_region
        %s237 = ssub.s32 %s15, 1
        %s238 = smul.u32 16, %s20
        %s239 = ssub.s32 25, %s238
        %p240 = scmp.lt.s32.totalorder %s239, 16
        %s241 = scalar_select %p240, %s239, 16
        %s242 = smul.u32 128, %s241
        %p243 = scmp.lt.s32.totalorder %s238, 24
        %s244 = scalar_select %p243, %s238, 24
        %s245 = smul.addr %s244, 8
        %s246 = scalar_lea.vmem %s0, %s245
        %p247 = pneg %p41
        %p248 = pneg %p38
        %p249 = scmp.lt.s32.totalorder %s20, 1
        %s250 = scalar_select %p249, %s20, 1
        %s251 = scalar_lea.vmem %s1, %s250
        %p252 = pneg %p67
        %p253 = pneg %p64
        %p254 = pneg %p88
        %p255 = pneg %p85
        %p256 = pneg %p109
        %p257 = pneg %p106
        %p258 = pneg %p130
        %p259 = pneg %p127
        %p260 = pneg %p151
        %p261 = pneg %p148
        %p262 = pneg %p177
        %p263 = pneg %p174
        %s264 = sand.u32 %s164, 1
        %s265 = scalar_lea.sflag [#allocation3], %s264
        %s266 = sand.u32 %s164, 1
        %s267 = smul.addr %s266, 8
        %s268 = scalar_lea.vmem [#allocation2], %s267
        %s269 = smul.u32 16, %s20
        %s270 = ssub.s32 25, %s269
        %p271 = scmp.lt.s32.totalorder %s270, 16
        %s272 = scalar_select %p271, %s270, 16
        %s273 = smul.u32 128, %s272
        %p274 = scmp.lt.s32.totalorder %s269, 24
        %s275 = scalar_select %p274, %s269, 24
        %s276 = smul.addr %s275, 8
        %s277 = scalar_lea.vmem %s0, %s276
        %s278 = smul.u32 16, %s20
        %s279 = ssub.s32 25, %s278
        %p280 = scmp.lt.s32.totalorder %s279, 16
        %s281 = scalar_select %p280, %s279, 16
        %s282 = smul.u32 128, %s281
        %p283 = scmp.lt.s32.totalorder %s20, 1
        %s284 = scalar_select %p283, %s20, 1
        %s285 = scalar_lea.vmem %s1, %s284
        %v286 = vld [vmem:[%s2] sm:$0xff]
        %v287 = vld [vmem:[%s2 + $0x8] sm:$0xff]
        %v288 = vld [vmem:[%s2 + $0x10] sm:$0xff]
        %v289 = vld [vmem:[%s2 + $0x18] sm:$0xff]
        %v290 = vld [vmem:[%s2 + $0x20] sm:$0xff]
        %v291 = vld [vmem:[%s2 + $0x28] sm:$0xff]
        %v292 = vld [vmem:[%s2 + $0x30] sm:$0xff]
        %v293 = vld [vmem:[%s2 + $0x38] sm:$0xff]
        %v294 = vld [vmem:[%s277] sm:$0xff]
        %v295 = vld [vmem:[%s277 + $0x8] sm:$0xff]
        %v296 = vld [vmem:[%s277 + $0x10] sm:$0xff]
        %v297 = vld [vmem:[%s277 + $0x18] sm:$0xff]
        %v298 = vld [vmem:[%s277 + $0x20] sm:$0xff]
        %v299 = vld [vmem:[%s277 + $0x28] sm:$0xff]
        %v300 = vld [vmem:[%s277 + $0x30] sm:$0xff]
        %v301 = vld [vmem:[%s277 + $0x38] sm:$0xff]
        %v302 = vld [vmem:[%s277 + $0x40] sm:$0xff]
        %v303 = vld [vmem:[%s277 + $0x48] sm:$0xff]
        %v304 = vld [vmem:[%s277 + $0x50] sm:$0xff]
        %v305 = vld [vmem:[%s277 + $0x58] sm:$0xff]
        %v306 = vld [vmem:[%s277 + $0x60] sm:$0xff]
        %v307 = vld [vmem:[%s277 + $0x68] sm:$0xff]
        %v308 = vld [vmem:[%s277 + $0x70] sm:$0xff]
        %v309 = vld [vmem:[%s277 + $0x78] sm:$0xff]
        %v310 = vld [vmem:[%s3] sm:$0xff]
        %v311 = vld [vmem:[%s3 + $0x8] sm:$0xff]
        %v312 = vld [vmem:[%s3 + $0x10] sm:$0xff]
        %v313 = vld [vmem:[%s3 + $0x18] sm:$0xff]
        %v314 = vld [vmem:[%s3 + $0x20] sm:$0xff]
        %v315 = vld [vmem:[%s3 + $0x28] sm:$0xff]
        %v316 = vld [vmem:[%s3 + $0x30] sm:$0xff]
        %v317 = vld [vmem:[%s3 + $0x38] sm:$0xff]
        %319 = vset.pattern.permute.xlu0 0
        %320 = vperm.xlu0 %319, %v310
        %v321 = vpop.permute.xlu0 %320
        %324 = vset.pattern.permute.xlu0 0
        %325 = vperm.xlu0 %324, %v311
        %v326 = vpop.permute.xlu0 %325
        %329 = vset.pattern.permute.xlu0 0
        %330 = vperm.xlu0 %329, %v312
        %v331 = vpop.permute.xlu0 %330
        %334 = vset.pattern.permute.xlu0 0
        %335 = vperm.xlu0 %334, %v313
        %v336 = vpop.permute.xlu0 %335
        %339 = vset.pattern.permute.xlu0 0
        %340 = vperm.xlu0 %339, %v314
        %v341 = vpop.permute.xlu0 %340
        %344 = vset.pattern.permute.xlu0 0
        %345 = vperm.xlu0 %344, %v315
        %v346 = vpop.permute.xlu0 %345
        %349 = vset.pattern.permute.xlu0 0
        %350 = vperm.xlu0 %349, %v316
        %v351 = vpop.permute.xlu0 %350
        %354 = vset.pattern.permute.xlu0 0
        %355 = vperm.xlu0 %354, %v317
        %v356 = vpop.permute.xlu0 %355
        %vm358 = vcmask 130048
        %v360 = vsel %vm358, %v286, 0
        %v363 = vsel %vm358, %v287, 0
        %v366 = vsel %vm358, %v288, 0
        %v369 = vsel %vm358, %v289, 0
        %v372 = vsel %vm358, %v290, 0
        %v375 = vsel %vm358, %v291, 0
        %v378 = vsel %vm358, %v292, 0
        %v381 = vsel %vm358, %v293, 0
        %v384 = vsel %vm358, %v294, 0
        %v387 = vsel %vm358, %v295, 0
        %v390 = vsel %vm358, %v296, 0
        %v393 = vsel %vm358, %v297, 0
        %v396 = vsel %vm358, %v298, 0
        %v399 = vsel %vm358, %v299, 0
        %v402 = vsel %vm358, %v300, 0
        %v405 = vsel %vm358, %v301, 0
        %v408 = vsel %vm358, %v302, 0
        %v411 = vsel %vm358, %v303, 0
        %v414 = vsel %vm358, %v304, 0
        %v417 = vsel %vm358, %v305, 0
        %v420 = vsel %vm358, %v306, 0
        %v423 = vsel %vm358, %v307, 0
        %v426 = vsel %vm358, %v308, 0
        %v429 = vsel %vm358, %v309, 0
        %431 = vmatprep.subr.mxu0 0.0
        %432 = vmatpush1.xpose.msra.mxu0 %v429
        %433 = vmatprep.subr.mxu0 0.0
        %434 = vmatpush1.xpose.msra.mxu0 %v426
        %435 = vmatprep.subr.mxu0 0.0
        %436 = vmatpush1.xpose.msra.mxu0 %v423
        %437 = vmatprep.subr.mxu0 0.0
        %438 = vmatpush1.xpose.msra.mxu0 %v420
        %439 = vmatprep.subr.mxu0 0.0
        %440 = vmatpush1.xpose.msra.mxu0 %v417
        %441 = vmatprep.subr.mxu0 0.0
        %442 = vmatpush1.xpose.msra.mxu0 %v414
        %443 = vmatprep.subr.mxu0 0.0
        %444 = vmatpush1.xpose.msra.mxu0 %v411
        %445 = vmatprep.subr.mxu0 0.0
        %446 = vmatpush1.xpose.msra.mxu0 %v408
        %447 = vmatprep.subr.mxu0 0.0
        %448 = vmatpush1.xpose.msra.mxu0 %v405
        %449 = vmatprep.subr.mxu0 0.0
        %450 = vmatpush1.xpose.msra.mxu0 %v402
        %451 = vmatprep.subr.mxu0 0.0
        %452 = vmatpush1.xpose.msra.mxu0 %v399
        %453 = vmatprep.subr.mxu0 0.0
        %454 = vmatpush1.xpose.msra.mxu0 %v396
        %455 = vmatprep.subr.mxu0 0.0
        %456 = vmatpush1.xpose.msra.mxu0 %v393
        %457 = vmatprep.subr.mxu0 0.0
        %458 = vmatpush1.xpose.msra.mxu0 %v390
        %459 = vmatprep.subr.mxu0 0.0
        %460 = vmatpush1.xpose.msra.mxu0 %v387
        %461 = vmatprep.subr.mxu0 0.0
        %462 = vmatpush1.xpose.msra.mxu0 %v384
        %463 = vmatprep.subr.mxu0 0.0
        %464 = vmatpush2.xpose.msra.mxu0 0.0
        %465 = vmatprep.subr.mxu0 0.0
        %466 = vmatpush2.xpose.msra.mxu0 0.0
        %467 = vmatprep.subr.mxu0 0.0
        %468 = vmatpush2.xpose.msra.mxu0 0.0
        %469 = vmatprep.subr.mxu0 0.0
        %470 = vmatpush2.xpose.msra.mxu0 0.0
        %471 = vmatprep.subr.mxu0 0.0
        %472 = vmatpush2.xpose.msra.mxu0 0.0
        %473 = vmatprep.subr.mxu0 0.0
        %474 = vmatpush2.xpose.msra.mxu0 0.0
        %475 = vmatprep.subr.mxu0 0.0
        %476 = vmatpush2.xpose.msra.mxu0 0.0
        %477 = vmatprep.subr.mxu0 0.0
        %478 = vmatpush2.xpose.msra.mxu0 0.0
        %479 = vmatprep.subr.mxu0 0.0
        %480 = vmatpush2.xpose.msra.mxu0 0.0
        %481 = vmatprep.subr.mxu0 0.0
        %482 = vmatpush2.xpose.msra.mxu0 0.0
        %483 = vmatprep.subr.mxu0 0.0
        %484 = vmatpush2.xpose.msra.mxu0 0.0
        %485 = vmatprep.subr.mxu0 0.0
        %486 = vmatpush2.xpose.msra.mxu0 0.0
        %487 = vmatprep.subr.mxu0 0.0
        %488 = vmatpush2.xpose.msra.mxu0 0.0
        %489 = vmatprep.subr.mxu0 0.0
        %490 = vmatpush2.xpose.msra.mxu0 0.0
        %491 = vmatprep.subr.mxu0 0.0
        %492 = vmatpush2.xpose.msra.mxu0 0.0
        %493 = vmatprep.subr.mxu0 0.0
        %494 = vmatpush2.xpose.msra.mxu0 0.0
        %495 = vmatprep.mubr.f32.mxu0 0.0
        %496 = vmatmul.mubr.f32.gmra.mxu0 %v360
        %v497 = vpop.f32.mrf.mxu0
        %v498 = vadd.f32 %v321, %v497
        %v499 = vpop.f32.mrf.mxu0
        %500 = vmatprep.mubr.f32.mxu0 0.0
        %501 = vmatmul.mubr.f32.gmra.mxu0 %v363
        %v502 = vpop.f32.mrf.mxu0
        %v503 = vadd.f32 %v326, %v502
        %v504 = vpop.f32.mrf.mxu0
        %505 = vmatprep.mubr.f32.mxu0 0.0
        %506 = vmatmul.mubr.f32.gmra.mxu0 %v366
        %v507 = vpop.f32.mrf.mxu0
        %v508 = vadd.f32 %v331, %v507
        %v509 = vpop.f32.mrf.mxu0
        %510 = vmatprep.mubr.f32.mxu0 0.0
        %511 = vmatmul.mubr.f32.gmra.mxu0 %v369
        %v512 = vpop.f32.mrf.mxu0
        %v513 = vadd.f32 %v336, %v512
        %v514 = vpop.f32.mrf.mxu0
        %515 = vmatprep.mubr.f32.mxu0 0.0
        %516 = vmatmul.mubr.f32.gmra.mxu0 %v372
        %v517 = vpop.f32.mrf.mxu0
        %v518 = vadd.f32 %v341, %v517
        %v519 = vpop.f32.mrf.mxu0
        %520 = vmatprep.mubr.f32.mxu0 0.0
        %521 = vmatmul.mubr.f32.gmra.mxu0 %v375
        %v522 = vpop.f32.mrf.mxu0
        %v523 = vadd.f32 %v346, %v522
        %v524 = vpop.f32.mrf.mxu0
        %525 = vmatprep.mubr.f32.mxu0 0.0
        %526 = vmatmul.mubr.f32.gmra.mxu0 %v378
        %v527 = vpop.f32.mrf.mxu0
        %v528 = vadd.f32 %v351, %v527
        %v529 = vpop.f32.mrf.mxu0
        %530 = vmatprep.mubr.f32.mxu0 0.0
        %531 = vmatmul.mubr.f32.gmra.mxu0 %v381
        %v532 = vpop.f32.mrf.mxu0
        %v533 = vadd.f32 %v356, %v532
        %v534 = vpop.f32.mrf.mxu0
        %535 = vdwg.mxu0
        %v536 = vtanh.pop %v498
        %v537 = vtanh.pop %v503
        %v538 = vtanh.pop %v508
        %v539 = vtanh.pop %v513
        %v540 = vtanh.pop %v518
        %v541 = vtanh.pop %v523
        %v542 = vtanh.pop %v528
        %v543 = vtanh.pop %v533
        %v544 = vld [vmem:[%s4] sm:$0x3f]
        %v545 = vld [vmem:[%s5] sm:$0x3f]
        %547 = vset.pattern.permute.xlu0 0
        %548 = vperm.xlu0 %547, %v545
        %v549 = vpop.permute.xlu0 %548
        %vm551 = vcmask 523264
        %v553 = vsel %vm551, %v544, 0
        %555 = vmatprep.subr.mxu0 0.0
        %556 = vmatpush1.msra.mxu0 0.0
        %557 = vmatprep.subr.mxu0 0.0
        %558 = vmatpush1.msra.mxu0 0.0
        %559 = vmatprep.subr.mxu0 0.0
        %560 = vmatpush1.msra.mxu0 0.0
        %561 = vmatprep.subr.mxu0 0.0
        %562 = vmatpush1.msra.mxu0 0.0
        %563 = vmatprep.subr.mxu0 0.0
        %564 = vmatpush1.msra.mxu0 0.0
        %565 = vmatprep.subr.mxu0 0.0
        %566 = vmatpush1.msra.mxu0 0.0
        %567 = vmatprep.subr.mxu0 0.0
        %568 = vmatpush1.msra.mxu0 0.0
        %569 = vmatprep.subr.mxu0 0.0
        %570 = vmatpush1.msra.mxu0 0.0
        %571 = vmatprep.subr.mxu0 0.0
        %572 = vmatpush1.msra.mxu0 %v543
        %573 = vmatprep.subr.mxu0 0.0
        %574 = vmatpush1.msra.mxu0 %v542
        %575 = vmatprep.subr.mxu0 0.0
        %576 = vmatpush1.msra.mxu0 %v541
        %577 = vmatprep.subr.mxu0 0.0
        %578 = vmatpush1.msra.mxu0 %v540
        %579 = vmatprep.subr.mxu0 0.0
        %580 = vmatpush1.msra.mxu0 %v539
        %581 = vmatprep.subr.mxu0 0.0
        %582 = vmatpush1.msra.mxu0 %v538
        %583 = vmatprep.subr.mxu0 0.0
        %584 = vmatpush1.msra.mxu0 %v537
        %585 = vmatprep.subr.mxu0 0.0
        %586 = vmatpush1.msra.mxu0 %v536
        %587 = vmatprep.subr.mxu0 0.0
        %588 = vmatpush2.msra.mxu0 0.0
        %589 = vmatprep.subr.mxu0 0.0
        %590 = vmatpush2.msra.mxu0 0.0
        %591 = vmatprep.subr.mxu0 0.0
        %592 = vmatpush2.msra.mxu0 0.0
        %593 = vmatprep.subr.mxu0 0.0
        %594 = vmatpush2.msra.mxu0 0.0
        %595 = vmatprep.subr.mxu0 0.0
        %596 = vmatpush2.msra.mxu0 0.0
        %597 = vmatprep.subr.mxu0 0.0
        %598 = vmatpush2.msra.mxu0 0.0
        %599 = vmatprep.subr.mxu0 0.0
        %600 = vmatpush2.msra.mxu0 0.0
        %601 = vmatprep.subr.mxu0 0.0
        %602 = vmatpush2.msra.mxu0 0.0
        %603 = vmatprep.subr.mxu0 0.0
        %604 = vmatpush2.msra.mxu0 0.0
        %605 = vmatprep.subr.mxu0 0.0
        %606 = vmatpush2.msra.mxu0 0.0
        %607 = vmatprep.subr.mxu0 0.0
        %608 = vmatpush2.msra.mxu0 0.0
        %609 = vmatprep.subr.mxu0 0.0
        %610 = vmatpush2.msra.mxu0 0.0
        %611 = vmatprep.subr.mxu0 0.0
        %612 = vmatpush2.msra.mxu0 0.0
        %613 = vmatprep.subr.mxu0 0.0
        %614 = vmatpush2.msra.mxu0 0.0
        %615 = vmatprep.subr.mxu0 0.0
        %616 = vmatpush2.msra.mxu0 0.0
        %617 = vmatprep.subr.mxu0 0.0
        %618 = vmatpush2.msra.mxu0 0.0
        %619 = vmatprep.mubr.f32.mxu0 0.0
        %620 = vmatmul.mubr.f32.gmra.mxu0 %v553
        %v621 = vpop.f32.mrf.mxu0
        %v622 = vadd.f32 %v549, %v621
        %v623 = vpop.f32.mrf.mxu0
        %624 = vdwg.mxu0
        %vm625 = vcmask 1045504
        %v626 = vsel %vm625, %v622, -inf
        %v627 = vrot.slane %v626, 4
        %v628 = vmax.f32 %v626, %v627
        %v629 = vrot.slane %v628, 2
        %v630 = vmax.f32 %v628, %v629
        %v631 = vrot.slane %v630, 1
        %v632 = vmax.f32 %v630, %v631
        %v633 = vsub.f32 %v622, %v632
        %v634 = vmul.f32 %v633, 1.442695
        %v635 = vpow.pop %v634
        %v636 = vsel %vm625, %v635, 0.0
        %v637 = vrot.slane %v636, 4
        %v638 = vadd.f32 %v636, %v637
        %v639 = vrot.slane %v638, 2
        %v640 = vadd.f32 %v638, %v639
        %v641 = vrot.slane %v640, 1
        %v642 = vadd.f32 %v640, %v641
        %v643 = vlog2.pop %v642
        %v644 = vmul.f32 %v643, 0.6931472
        %v645 = vsub.f32 %v633, %v644
        %v646 = vlaneseq
        %v647 = vshrl.u32 %v646, 7
        %v648 = vld [vmem:[%s285] sm:$0x1]
        %v649 = vlaneseq
        %v650 = vshrl.u32 %v649, 7
        %v651 = vsub.s32 0, %v650
        %v652 = vrot.slane %v648, %v651
        %vm653 = vcmp.eq.s32.totalorder %v647, %v652
        %v654 = vsel %vm653, 1, 0
        %v655 = vcvt.s32.f32 %v654
        %v656 = vmul.f32 %v655, %v645
        %v657 = vsel %vm625, %v656, 0.0
        %v658 = vrot.slane %v657, 4
        %v659 = vadd.f32 %v657, %v658
        %v660 = vrot.slane %v659, 2
        %v661 = vadd.f32 %v659, %v660
        %v662 = vrot.slane %v661, 1
        %v663 = vadd.f32 %v661, %v662
        %664 = vst [vmem:[%s268] sm:$0x3f] %v622
        %665 = vst [vmem:[%s268 + $0x6] sm:$0x1] %v663
        %s666 = sand.u32 %s164, 1
        %s667 = scalar_lea.sflag [#allocation3], %s666
        %s668 = sand.u32 %s164, 1
        %s669 = smul.addr %s668, 8
        %s670 = scalar_lea.vmem [#allocation2], %s669
        // Predicated region
        $region45: #{tpu_custom_call.1} parent=43 // pred_check
          %p671 = pneg %p174
        $region46: #{tpu_custom_call.1} parent=43 // pred_check_branch
          %673 = sbr.rel (%p671) target = $region48
        $region47: #{tpu_custom_call.1} parent=43 // pred_region
          %s675 = ssub.s32 128, 128
          %676 = vsyncadd %s667, %s675
          %s677 = smul.addr %s20, 128
          %s678 = scalar_lea.hbm %s6, %s677
          %s680 = sshll.u32 %s670, 4
          %s681 = int_to_ptr.vmem [resolvable:$true] %s680
          %683 = dma.vmem_to_hbm [thread:$0]  %s681, 128, %s678, %s667
        $region48: #{tpu_custom_call.1} parent=43 // pred_fallthru
          _
      $region44: #{tpu_custom_call.1} parent=5 // pred_fallthru
        _
      %p684 = scmp.le.s32.totalorder 2, %s15
      // Predicated region
      $region49: #{tpu_custom_call.1} parent=5 // pred_check
        %p685 = pneg %p684
      $region50: #{tpu_custom_call.1} parent=5 // pred_check_branch
        %687 = sbr.rel (%p685) target = $region52
      $region51: #{tpu_custom_call.1} parent=5 // pred_region
        %s688 = ssub.s32 %s15, 2
        // Predicated region
        $region53: #{tpu_custom_call.1} parent=51 // pred_check
          %p689 = pneg %p180
        $region54: #{tpu_custom_call.1} parent=51 // pred_check_branch
          %691 = sbr.rel (%p689) target = $region56
        $region55: #{tpu_custom_call.1} parent=51 // pred_region
          %s692 = sand.u32 %s165, 1
          %s693 = scalar_lea.sflag [#allocation3], %s692
          %s694 = sand.u32 %s165, 1
          %s695 = smul.addr %s694, 8
          %s696 = scalar_lea.vmem [#allocation2], %s695
          %697 = dma.done %s693, 128
        $region56: #{tpu_custom_call.1} parent=51 // pred_fallthru
          _
      $region52: #{tpu_custom_call.1} parent=5 // pred_fallthru
        _
    $region6: #{tpu_custom_call.1} parent=1 // loop_footer
      %s19 = sadd.s32 1, %s15
    $region7: #{tpu_custom_call.1} parent=1 // loop_footer_branch
      %14 = sbr.rel target = $region3
    $region8: #{tpu_custom_call.1} parent=1 // loop_exit
      _
    %698 = vsyncpa [#allocation3], 1
    %s699 = scalar_lea.sflag [#allocation3], 1
    %700 = vsyncpa %s699, 1

</llo_original>
